<compile_context>
chip_gen: v6e
topology: v6e:2x2x1
jax: 0.10.0
libtpu: 0.0.40
codegen_flags: <defaults>
</compile_context>

<pallas_src>
import jax
import jax.numpy as jnp
import numpy as np
from jax import lax
from jax.experimental import pallas as pl
from jax.experimental.pallas import tpu as pltpu


def _round_up(x, m):
    return ((x + m - 1) // m) * m


# ----------------------------------------------------------------------------
# One-time parameter preparation (outside the jitted forward).
#   conv weights  -> fused-tap banded block-Toeplitz matmul weights (lane-padded)
#   conv biases   -> lane-replicated, zero-padded bias rows
#   linear weight -> columns permuted from torch-NCHW-flatten order into the
#                    kernel's (h, w*C2 + c) layout, flattened to one matmul
# ----------------------------------------------------------------------------
def prepare_params(params, H, W):
    w1 = np.asarray(params["w1"], np.float32)    # (C1, C, K, K)
    b1 = np.asarray(params["b1"], np.float32)
    w2 = np.asarray(params["w2"], np.float32)    # (C2, C1, K, K)
    b2 = np.asarray(params["b2"], np.float32)
    wf = np.asarray(params["wf"], np.float32)    # (N, C2*H2*W2)  torch order
    bf = np.asarray(params["bf"], np.float32)

    C1, C, K, _ = w1.shape
    C2 = w2.shape[0]
    N = wf.shape[0]
    H1, W1 = H - K + 1, W - K + 1
    H2, W2 = H1 - K + 1, W1 - K + 1
    C1P = _round_up(W1 * C1, 128)
    C2P = _round_up(W2 * C2, 128)

    # conv1 fused taps: T1f[i*W*C + win*C + ci, w*C1 + co] = w1[co, ci, i, win-w]
    T1 = np.zeros((K, W * C, C1P), np.float32)
    for i in range(K):
        for j in range(K):
            blk = w1[:, :, i, j].T               # (C, C1)
            for w in range(W1):
                T1[i, (w + j) * C:(w + j + 1) * C, w * C1:(w + 1) * C1] = blk
    T1f = T1.reshape(K * W * C, C1P)

    # conv2 fused taps (input lanes follow h1's padded (w*C1+c) layout):
    # T2f[i*C1P + win*C1 + ci, w*C2 + co] = w2[co, ci, i, win-w]
    T2 = np.zeros((K, C1P, C2P), np.float32)
    for i in range(K):
        for j in range(K):
            blk = w2[:, :, i, j].T               # (C1, C2)
            for w in range(W2):
                T2[i, (w + j) * C1:(w + j + 1) * C1, w * C2:(w + 1) * C2] = blk
    T2f = T2.reshape(K * C1P, C2P)

    # predictor: WFf[h*C2P + w*C2 + co, n] = wf[n, co*H2*W2 + h*W2 + w]
    wf4 = wf.reshape(N, C2, H2, W2)
    WF = np.zeros((H2, C2P, N), np.float32)
    WF[:, :W2 * C2, :] = np.transpose(wf4, (2, 3, 1, 0)).reshape(H2, W2 * C2, N)
    WFf = WF.reshape(H2 * C2P, N)

    b1p = np.zeros((1, C1P), np.float32)
    b1p[0, :W1 * C1] = np.tile(b1, W1)
    b2p = np.zeros((1, C2P), np.float32)
    b2p[0, :W2 * C2] = np.tile(b2, W2)

    return {"t1": jnp.asarray(T1f), "b1": jnp.asarray(b1p),
            "t2": jnp.asarray(T2f), "b2": jnp.asarray(b2p),
            "wf": jnp.asarray(WFf), "bf": jnp.asarray(bf.reshape(1, N))}


# ----------------------------------------------------------------------------
# Build the fused forward for a fixed (static) configuration.
# ----------------------------------------------------------------------------
def make_forward(B, C, H, W, C1, C2, K, N):
    H1, W1 = H - K + 1, W - K + 1
    H2, W2 = H1 - K + 1, W1 - K + 1
    KWC = K * W * C
    C1P = _round_up(W1 * C1, 128)
    C2P = _round_up(W2 * C2, 128)

    # Batch tiling: fold the whole batch into M when small; tiles of 8 images
    # otherwise (keeps >=2 parallel grid steps for v7x's two TCs once B>=16).
    B_TILE = B if B <= 8 else 8
    assert B % B_TILE == 0, "demo assumes B divisible by the batch tile"
    n_tiles = B // B_TILE
    M1 = B_TILE * H1              # conv1 matmul rows per grid step
    M2 = M1 - (K - 1)             # conv2 matmul rows per grid step

    def kernel(x1_ref, t1_ref, b1_ref, t2_ref, b2_ref, wf_ref, bf_ref,
               o_ref, h2s_ref):
        # ---- conv1 + bias + ReLU: ONE matmul, batch folded into M ----------
        h1 = jnp.dot(x1_ref[...], t1_ref[...],
                     preferred_element_type=jnp.float32)
        h1 = jnp.maximum(h1 + b1_ref[...], 0.0)            # (M1, C1P) value

        # ---- conv2 + bias + ReLU: 3 taps fused into ONE matmul -------------
        # 128-aligned lane-concat of row-shifted windows of h1 (kept in vregs,
        # no scratch round trip).  Rows mixing two images are never read.
        h1cat = jnp.concatenate([h1[i:i + M2, :] for i in range(K)], axis=1)
        h2 = jnp.dot(h1cat, t2_ref[...], preferred_element_type=jnp.float32)
        h2 = jnp.maximum(h2 + b2_ref[...], 0.0)             # (M2, C2P)

        # ---- predictor: flatten-free single matmul + Softplus --------------
        # Stage h2 once in VMEM, gather row h of every image with strided
        # sublane loads, lane-concat (128-aligned) into (B_TILE, H2*C2P).
        h2s_ref[...] = h2
        feat = jnp.concatenate(
            [h2s_ref[pl.ds(h, B_TILE, stride=H1), :] for h in range(H2)],
            axis=1)                                         # (B_TILE, H2*C2P)
        z = jnp.dot(feat, wf_ref[...],
                    preferred_element_type=jnp.float32) + bf_ref[...]
        # softplus(z) = max(z,0) + log(1 + exp(-|z|))
        o_ref[...] = (jnp.maximum(z, 0.0)
                      + jnp.log(1.0 + jnp.exp(-jnp.abs(z)))).astype(o_ref.dtype)

    flops = 2 * n_tiles * (M1 * KWC * C1P
                           + M2 * (K * C1P) * C2P
                           + B_TILE * (H2 * C2P) * N)
    bytes_accessed = 4 * (B * H1 * KWC
                          + KWC * C1P + C1P
                          + K * C1P * C2P + C2P
                          + H2 * C2P * N + N + B * N)

    call = pl.pallas_call(
        kernel,
        out_shape=jax.ShapeDtypeStruct((B, N), jnp.float32),
        grid_spec=pltpu.PrefetchScalarGridSpec(
            num_scalar_prefetch=0,
            grid=(n_tiles,),
            in_specs=[
                pl.BlockSpec((M1, KWC), lambda t: (t, 0)),        # tap-concat input
                # Constant index maps => blocks stay resident across grid steps
                # (no per-step re-DMA); total weight footprint < 1 MiB.
                pl.BlockSpec((KWC, C1P), lambda t: (0, 0)),       # conv1 Toeplitz
                pl.BlockSpec((1, C1P), lambda t: (0, 0)),         # conv1 bias
                pl.BlockSpec((K * C1P, C2P), lambda t: (0, 0)),   # conv2 Toeplitz
                pl.BlockSpec((1, C2P), lambda t: (0, 0)),         # conv2 bias
                pl.BlockSpec((H2 * C2P, N), lambda t: (0, 0)),    # linear weight
                pl.BlockSpec((1, N), lambda t: (0, 0)),           # linear bias
            ],
            out_specs=pl.BlockSpec((B_TILE, N), lambda t: (t, 0)),
            scratch_shapes=[pltpu.VMEM((M2, C2P), jnp.float32)],  # h2 staging
        ),
        compiler_params=pltpu.CompilerParams(
            dimension_semantics=("parallel",)),
        cost_estimate=pl.CostEstimate(
            flops=flops, transcendentals=2 * B * N,
            bytes_accessed=bytes_accessed),
    )

    def forward(x, prep):
        # Cheap wrapper layout work on the ~8 KB input: NCHW -> NHWC row strips,
        # then concatenate the K kernel-row taps along lanes so conv1 is one
        # batched matmul with zero in-kernel slicing.
        xn = jnp.transpose(x, (0, 2, 3, 1)).reshape(B, H, W * C)
        x1 = jnp.concatenate([xn[:, i:i + H1, :] for i in range(K)], axis=-1)
        x1 = x1.reshape(B * H1, KWC)
        return call(x1, prep["t1"], prep["b1"], prep["t2"], prep["b2"],
                    prep["wf"], prep["bf"])

    return jax.jit(forward)


# ----------------------------------------------------------------------------
# Pure-JAX reference (correctness check)
# ----------------------------------------------------------------------------
def reference_forward(x, params):
    with jax.default_matmul_precision("highest"):
        def conv(x, w, b):
            y = lax.conv_general_dilated(
                x, w, window_strides=(1, 1), padding="VALID",
                dimension_numbers=("NCHW", "OIHW", "NCHW"))
            return jnp.maximum(y + b[None, :, None, None], 0.0)

        h = conv(x, params["w1"], params["b1"])
        h = conv(h, params["w2"], params["b2"])
        flat = h.reshape(h.shape[0], -1)
        y = flat @ params["wf"].T + params["bf"]
        return jnp.logaddexp(y, 0.0)


if __name__ == "__main__":
    # Small shapes: batch=2, channels=4, spatial=16x16, n_neurons=16
    B, C, H, W = 2, 4, 16, 16
    C1 = C2 = 8
    K = 3
    H1, W1 = H - K + 1, W - K + 1          # 14, 14
    H2, W2 = H1 - K + 1, W1 - K + 1        # 12, 12
    n_neurons = 16
    feat = C2 * H2 * W2                    # 1152

    key = jax.random.PRNGKey(0)
    ks = jax.random.split(key, 7)
    params = {
        "w1": jax.random.normal(ks[0], (C1, C, K, K), jnp.float32) * 0.1,
        "b1": jax.random.normal(ks[1], (C1,), jnp.float32) * 0.1,
        "w2": jax.random.normal(ks[2], (C2, C1, K, K), jnp.float32) * 0.1,
        "b2": jax.random.normal(ks[3], (C2,), jnp.float32) * 0.1,
        "wf": jax.random.normal(ks[4], (n_neurons, feat), jnp.float32) * 0.02,
        "bf": jax.random.normal(ks[5], (n_neurons,), jnp.float32) * 0.1,
    }
    x = jax.random.normal(ks[6], (B, C, H, W), jnp.float32)

    prep = prepare_params(params, H, W)               # one-time weight prep
    forward = make_forward(B, C, H, W, C1, C2, K, n_neurons)

    y = jax.block_until_ready(forward(x, prep))

    y_ref = jax.block_until_ready(reference_forward(x, params))
    np.testing.assert_allclose(np.asarray(y), np.asarray(y_ref),
                               rtol=1e-4, atol=1e-4)
    assert y.shape == (B, n_neurons)
    print("KERNEL_OK")
</pallas_src>

<mosaic_0001>
module attributes {stable_mosaic.version = 11 : i64} {
  func.func @kernel(%arg0: i32, %arg1: memref<28x192xf32, #tpu.memory_space<vmem>>, %arg2: memref<192x128xf32, #tpu.memory_space<vmem>>, %arg3: memref<1x128xf32, #tpu.memory_space<vmem>>, %arg4: memref<384x128xf32, #tpu.memory_space<vmem>>, %arg5: memref<1x128xf32, #tpu.memory_space<vmem>>, %arg6: memref<1536x16xf32, #tpu.memory_space<vmem>>, %arg7: memref<1x16xf32, #tpu.memory_space<vmem>>, %arg8: memref<2x16xf32, #tpu.memory_space<vmem>>, %arg9: memref<26x128xf32, #tpu.memory_space<vmem>>) attributes {dimension_semantics = [#tpu.dimension_semantics<parallel>], iteration_bounds = array<i64: 1>, scalar_prefetch = 0 : i64, scratch_operands = 1 : i64, tpu.core_type = #tpu.core_type<tc>, window_params = [{transform_indices = @transform_0, window_bounds = array<i64: 28, 192>}, {pipeline_mode = #tpu.pipeline_mode<synchronous>, transform_indices = @transform_1, window_bounds = array<i64: 192, 128>}, {pipeline_mode = #tpu.pipeline_mode<synchronous>, transform_indices = @transform_2, window_bounds = array<i64: 1, 128>}, {pipeline_mode = #tpu.pipeline_mode<synchronous>, transform_indices = @transform_3, window_bounds = array<i64: 384, 128>}, {pipeline_mode = #tpu.pipeline_mode<synchronous>, transform_indices = @transform_4, window_bounds = array<i64: 1, 128>}, {pipeline_mode = #tpu.pipeline_mode<synchronous>, transform_indices = @transform_5, window_bounds = array<i64: 1536, 16>}, {pipeline_mode = #tpu.pipeline_mode<synchronous>, transform_indices = @transform_6, window_bounds = array<i64: 1, 16>}, {transform_indices = @transform_7, window_bounds = array<i64: 2, 16>}]} {
    %c0 = arith.constant 0 : index
    %c0_0 = arith.constant 0 : index
    %0 = vector.load %arg1[%c0, %c0_0] : memref<28x192xf32, #tpu.memory_space<vmem>>, vector<28x192xf32>
    %c0_1 = arith.constant 0 : index
    %c0_2 = arith.constant 0 : index
    %1 = vector.load %arg2[%c0_1, %c0_2] : memref<192x128xf32, #tpu.memory_space<vmem>>, vector<192x128xf32>
    %cst = arith.constant dense<0.000000e+00> : vector<28x128xf32>
    %2 = tpu.matmul %0, %1, %cst {dimension_numbers = #tpu.dot_dimension_numbers<[1], [0], [0], [1], [0, 0, 1, 1], [], []>} : vector<28x192xf32>, vector<192x128xf32>, vector<28x128xf32> -> vector<28x128xf32>
    %c0_3 = arith.constant 0 : index
    %c0_4 = arith.constant 0 : index
    %3 = vector.load %arg3[%c0_3, %c0_4] : memref<1x128xf32, #tpu.memory_space<vmem>>, vector<1x128xf32>
    %4 = vector.broadcast %3 : vector<1x128xf32> to vector<28x128xf32>
    %5 = arith.addf %2, %4 : vector<28x128xf32>
    %cst_5 = arith.constant 0.000000e+00 : f32
    %6 = vector.broadcast %cst_5 : f32 to vector<28x128xf32>
    %7 = arith.maximumf %5, %6 : vector<28x128xf32>
    %8 = vector.extract_strided_slice %7 {offsets = [0, 0], sizes = [26, 128], strides = [1, 1]} : vector<28x128xf32> to vector<26x128xf32>
    %9 = vector.extract_strided_slice %7 {offsets = [1, 0], sizes = [26, 128], strides = [1, 1]} : vector<28x128xf32> to vector<26x128xf32>
    %10 = vector.extract_strided_slice %7 {offsets = [2, 0], sizes = [26, 128], strides = [1, 1]} : vector<28x128xf32> to vector<26x128xf32>
    %11 = tpu.concatenate %8, %9, %10 in 1 : vector<26x128xf32>, vector<26x128xf32>, vector<26x128xf32> -> vector<26x384xf32>
    %c0_6 = arith.constant 0 : index
    %c0_7 = arith.constant 0 : index
    %12 = vector.load %arg4[%c0_6, %c0_7] : memref<384x128xf32, #tpu.memory_space<vmem>>, vector<384x128xf32>
    %cst_8 = arith.constant dense<0.000000e+00> : vector<26x128xf32>
    %13 = tpu.matmul %11, %12, %cst_8 {dimension_numbers = #tpu.dot_dimension_numbers<[1], [0], [0], [1], [0, 0, 1, 1], [], []>} : vector<26x384xf32>, vector<384x128xf32>, vector<26x128xf32> -> vector<26x128xf32>
    %c0_9 = arith.constant 0 : index
    %c0_10 = arith.constant 0 : index
    %14 = vector.load %arg5[%c0_9, %c0_10] : memref<1x128xf32, #tpu.memory_space<vmem>>, vector<1x128xf32>
    %15 = vector.broadcast %14 : vector<1x128xf32> to vector<26x128xf32>
    %16 = arith.addf %13, %15 : vector<26x128xf32>
    %cst_11 = arith.constant 0.000000e+00 : f32
    %17 = vector.broadcast %cst_11 : f32 to vector<26x128xf32>
    %18 = arith.maximumf %16, %17 : vector<26x128xf32>
    %c0_12 = arith.constant 0 : index
    %c0_13 = arith.constant 0 : index
    %19 = vector.load %arg9[%c0_12, %c0_13] : memref<26x128xf32, #tpu.memory_space<vmem>>, vector<26x128xf32>
    tpu.vector_store %arg9[%c0_12, %c0_13], %18 {strides = array<i32>} : memref<26x128xf32, #tpu.memory_space<vmem>>, vector<26x128xf32>,
    %c0_14 = arith.constant 0 : index
    %c0_15 = arith.constant 0 : index
    %20 = tpu.strided_load %arg9[%c0_14, %c0_15] {strides = array<i32: 14, 1>} : memref<26x128xf32, #tpu.memory_space<vmem>>, vector<2x128xf32>
    %c1 = arith.constant 1 : index
    %c0_16 = arith.constant 0 : index
    %21 = tpu.strided_load %arg9[%c1, %c0_16] {strides = array<i32: 14, 1>} : memref<26x128xf32, #tpu.memory_space<vmem>>, vector<2x128xf32>
    %c2 = arith.constant 2 : index
    %c0_17 = arith.constant 0 : index
    %22 = tpu.strided_load %arg9[%c2, %c0_17] {strides = array<i32: 14, 1>} : memref<26x128xf32, #tpu.memory_space<vmem>>, vector<2x128xf32>
    %c3 = arith.constant 3 : index
    %c0_18 = arith.constant 0 : index
    %23 = tpu.strided_load %arg9[%c3, %c0_18] {strides = array<i32: 14, 1>} : memref<26x128xf32, #tpu.memory_space<vmem>>, vector<2x128xf32>
    %c4 = arith.constant 4 : index
    %c0_19 = arith.constant 0 : index
    %24 = tpu.strided_load %arg9[%c4, %c0_19] {strides = array<i32: 14, 1>} : memref<26x128xf32, #tpu.memory_space<vmem>>, vector<2x128xf32>
    %c5 = arith.constant 5 : index
    %c0_20 = arith.constant 0 : index
    %25 = tpu.strided_load %arg9[%c5, %c0_20] {strides = array<i32: 14, 1>} : memref<26x128xf32, #tpu.memory_space<vmem>>, vector<2x128xf32>
    %c6 = arith.constant 6 : index
    %c0_21 = arith.constant 0 : index
    %26 = tpu.strided_load %arg9[%c6, %c0_21] {strides = array<i32: 14, 1>} : memref<26x128xf32, #tpu.memory_space<vmem>>, vector<2x128xf32>
    %c7 = arith.constant 7 : index
    %c0_22 = arith.constant 0 : index
    %27 = tpu.strided_load %arg9[%c7, %c0_22] {strides = array<i32: 14, 1>} : memref<26x128xf32, #tpu.memory_space<vmem>>, vector<2x128xf32>
    %c8 = arith.constant 8 : index
    %c0_23 = arith.constant 0 : index
    %28 = tpu.strided_load %arg9[%c8, %c0_23] {strides = array<i32: 14, 1>} : memref<26x128xf32, #tpu.memory_space<vmem>>, vector<2x128xf32>
    %c9 = arith.constant 9 : index
    %c0_24 = arith.constant 0 : index
    %29 = tpu.strided_load %arg9[%c9, %c0_24] {strides = array<i32: 14, 1>} : memref<26x128xf32, #tpu.memory_space<vmem>>, vector<2x128xf32>
    %c10 = arith.constant 10 : index
    %c0_25 = arith.constant 0 : index
    %30 = tpu.strided_load %arg9[%c10, %c0_25] {strides = array<i32: 14, 1>} : memref<26x128xf32, #tpu.memory_space<vmem>>, vector<2x128xf32>
    %c11 = arith.constant 11 : index
    %c0_26 = arith.constant 0 : index
    %31 = tpu.strided_load %arg9[%c11, %c0_26] {strides = array<i32: 14, 1>} : memref<26x128xf32, #tpu.memory_space<vmem>>, vector<2x128xf32>
    %32 = tpu.concatenate %20, %21, %22, %23, %24, %25, %26, %27, %28, %29, %30, %31 in 1 : vector<2x128xf32>, vector<2x128xf32>, vector<2x128xf32>, vector<2x128xf32>, vector<2x128xf32>, vector<2x128xf32>, vector<2x128xf32>, vector<2x128xf32>, vector<2x128xf32>, vector<2x128xf32>, vector<2x128xf32>, vector<2x128xf32> -> vector<2x1536xf32>
    %c0_27 = arith.constant 0 : index
    %c0_28 = arith.constant 0 : index
    %33 = vector.load %arg6[%c0_27, %c0_28] : memref<1536x16xf32, #tpu.memory_space<vmem>>, vector<1536x16xf32>
    %cst_29 = arith.constant dense<0.000000e+00> : vector<2x16xf32>
    %34 = tpu.matmul %32, %33, %cst_29 {dimension_numbers = #tpu.dot_dimension_numbers<[1], [0], [0], [1], [0, 0, 1, 1], [], []>} : vector<2x1536xf32>, vector<1536x16xf32>, vector<2x16xf32> -> vector<2x16xf32>
    %c0_30 = arith.constant 0 : index
    %c0_31 = arith.constant 0 : index
    %35 = vector.load %arg7[%c0_30, %c0_31] : memref<1x16xf32, #tpu.memory_space<vmem>>, vector<1x16xf32>
    %36 = vector.broadcast %35 : vector<1x16xf32> to vector<2x16xf32>
    %37 = arith.addf %34, %36 : vector<2x16xf32>
    %cst_32 = arith.constant 0.000000e+00 : f32
    %38 = vector.broadcast %cst_32 : f32 to vector<2x16xf32>
    %39 = arith.maximumf %37, %38 : vector<2x16xf32>
    %40 = math.absf %37 : vector<2x16xf32>
    %cst_33 = arith.constant 0.000000e+00 : f32
    %41 = vector.broadcast %cst_33 : f32 to vector<2x16xf32>
    %42 = arith.subf %41, %40 : vector<2x16xf32>
    %43 = math.exp %42 : vector<2x16xf32>
    %cst_34 = arith.constant 1.000000e+00 : f32
    %44 = vector.broadcast %cst_34 : f32 to vector<2x16xf32>
    %45 = arith.addf %44, %43 : vector<2x16xf32>
    %46 = math.log %45 : vector<2x16xf32>
    %47 = arith.addf %39, %46 : vector<2x16xf32>
    %c0_35 = arith.constant 0 : index
    %c0_36 = arith.constant 0 : index
    %48 = vector.load %arg8[%c0_35, %c0_36] : memref<2x16xf32, #tpu.memory_space<vmem>>, vector<2x16xf32>
    tpu.vector_store %arg8[%c0_35, %c0_36], %47 {strides = array<i32>} : memref<2x16xf32, #tpu.memory_space<vmem>>, vector<2x16xf32>,
    return
  }
  func.func @transform_0(%arg0: i32) -> (i32, i32) {
    %c0_i32 = arith.constant 0 : i32
    %c0_i32_0 = arith.constant 0 : i32
    return %arg0, %c0_i32 : i32, i32
  }
  func.func @transform_1(%arg0: i32) -> (i32, i32) {
    %c0_i32 = arith.constant 0 : i32
    %c0_i32_0 = arith.constant 0 : i32
    %c0_i32_1 = arith.constant 0 : i32
    return %c0_i32, %c0_i32_0 : i32, i32
  }
  func.func @transform_2(%arg0: i32) -> (i32, i32) {
    %c0_i32 = arith.constant 0 : i32
    %c0_i32_0 = arith.constant 0 : i32
    %c0_i32_1 = arith.constant 0 : i32
    return %c0_i32, %c0_i32_0 : i32, i32
  }
  func.func @transform_3(%arg0: i32) -> (i32, i32) {
    %c0_i32 = arith.constant 0 : i32
    %c0_i32_0 = arith.constant 0 : i32
    %c0_i32_1 = arith.constant 0 : i32
    return %c0_i32, %c0_i32_0 : i32, i32
  }
  func.func @transform_4(%arg0: i32) -> (i32, i32) {
    %c0_i32 = arith.constant 0 : i32
    %c0_i32_0 = arith.constant 0 : i32
    %c0_i32_1 = arith.constant 0 : i32
    return %c0_i32, %c0_i32_0 : i32, i32
  }
  func.func @transform_5(%arg0: i32) -> (i32, i32) {
    %c0_i32 = arith.constant 0 : i32
    %c0_i32_0 = arith.constant 0 : i32
    %c0_i32_1 = arith.constant 0 : i32
    return %c0_i32, %c0_i32_0 : i32, i32
  }
  func.func @transform_6(%arg0: i32) -> (i32, i32) {
    %c0_i32 = arith.constant 0 : i32
    %c0_i32_0 = arith.constant 0 : i32
    %c0_i32_1 = arith.constant 0 : i32
    return %c0_i32, %c0_i32_0 : i32, i32
  }
  func.func @transform_7(%arg0: i32) -> (i32, i32) {
    %c0_i32 = arith.constant 0 : i32
    %c0_i32_0 = arith.constant 0 : i32
    return %arg0, %c0_i32 : i32, i32
  }
}

</mosaic_0001>

<llo_original>
// kernel: forward.1
$region0: #{forward.1}
  #allocation0 [shape = 'u32[]', space=smem, size = 0x4, offset = 0x4, fixed_abs, tag = 'smem constant byte address 0x4 - core index']
  #allocation1 [shape = 'u32[144,128]{1,0:T(1,128)}', space=vmem, size = 0x12000, scoped, tag = 'internal scratch']
  #allocation2 [shape = 'f32[26,128]{1,0:T(8,128)}', space=vmem, size = 0x4000, scoped, tag = 'scratch operand']
  %s0 = inlined_call_operand.vmem [shape: f32[28,192], index: 0, kind: input, shape index: {}]
  %s1 = inlined_call_operand.vmem [shape: f32[192,128], index: 1, kind: input, shape index: {}]
  %s2 = inlined_call_operand.vmem [shape: f32[1,128], index: 2, kind: input, shape index: {}]
  %s3 = inlined_call_operand.vmem [shape: f32[384,128], index: 3, kind: input, shape index: {}]
  %s4 = inlined_call_operand.vmem [shape: f32[1,128], index: 4, kind: input, shape index: {}]
  %s5 = inlined_call_operand.vmem [shape: f32[1536,16], index: 5, kind: input, shape index: {}]
  %s6 = inlined_call_operand.vmem [shape: f32[1,16], index: 6, kind: input, shape index: {}]
  %s7 = inlined_call_operand.hbm [shape: f32[2,16], index: 7, kind: output, shape index: {}]
  %s8 = sld [smem:[#allocation0]]
  $region38: #{forward.1} parent=0
    _
  %s10 = ssub.s32 1, %s8
  %s11 = scalar_select 0, %s10, %s8
  $region1: #{forward.1} parent=0
    #allocation3 [shape = 'u8[1024]{0}', space=vmem, size = 0x400, scoped, tag = 'output window, operand 0, single buffered']
    #allocation4 [shape = 's32[1]{0}', space=sflag, size = 0x4, scoped, tag = 'scoped memory for forward.1']
    %12 = vsyncpa [#allocation4], 0
    // Predicated region
    $region2: #{forward.1} parent=1 // pred_check
      _
    $region3: #{forward.1} parent=1 // pred_check_branch
      %14 = sbr.rel (0) target = $region5
    $region4: #{forward.1} parent=1 // pred_region
      _
    $region5: #{forward.1} parent=1 // pred_fallthru
      _
    // Predicated region
    $region6: #{forward.1} parent=1 // pred_check
      _
    $region7: #{forward.1} parent=1 // pred_check_branch
      %16 = sbr.rel (0) target = $region9
    $region8: #{forward.1} parent=1 // pred_region
      _
    $region9: #{forward.1} parent=1 // pred_fallthru
      _
    // Predicated region
    $region10: #{forward.1} parent=1 // pred_check
      _
    $region11: #{forward.1} parent=1 // pred_check_branch
      %18 = sbr.rel (0) target = $region13
    $region12: #{forward.1} parent=1 // pred_region
      _
    $region13: #{forward.1} parent=1 // pred_fallthru
      _
    // Predicated region
    $region14: #{forward.1} parent=1 // pred_check
      _
    $region15: #{forward.1} parent=1 // pred_check_branch
      %20 = sbr.rel (0) target = $region17
    $region16: #{forward.1} parent=1 // pred_region
      _
    $region17: #{forward.1} parent=1 // pred_fallthru
      _
    // Predicated region
    $region18: #{forward.1} parent=1 // pred_check
      _
    $region19: #{forward.1} parent=1 // pred_check_branch
      %22 = sbr.rel (0) target = $region21
    $region20: #{forward.1} parent=1 // pred_region
      _
    $region21: #{forward.1} parent=1 // pred_fallthru
      _
    // Predicated region
    $region22: #{forward.1} parent=1 // pred_check
      _
    $region23: #{forward.1} parent=1 // pred_check_branch
      %24 = sbr.rel (0) target = $region25
    $region24: #{forward.1} parent=1 // pred_region
      _
    $region25: #{forward.1} parent=1 // pred_fallthru
      _
    // Predicated region
    $region26: #{forward.1} parent=1 // pred_check
      _
    $region27: #{forward.1} parent=1 // pred_check_branch
      %26 = sbr.rel (0) target = $region29
    $region28: #{forward.1} parent=1 // pred_region
      _
    $region29: #{forward.1} parent=1 // pred_fallthru
      _
    %v27 = vld [vmem:[%s0] sm:$0xff]
    %v28 = vld [vmem:[%s0 + $0x8] sm:$0xff]
    %v29 = vld [vmem:[%s0 + $0x10] sm:$0xff]
    %v30 = vld [vmem:[%s0 + $0x18] sm:$0xff]
    %v31 = vld [vmem:[%s0 + $0x20] sm:$0xff]
    %v32 = vld [vmem:[%s0 + $0x28] sm:$0xff]
    %v33 = vld [vmem:[%s0 + $0x30] sm:$0xf]
    %v34 = vld [vmem:[%s0 + $0x38] sm:$0xf]
    %v35 = vld [vmem:[%s1] sm:$0xff]
    %v36 = vld [vmem:[%s1 + $0x8] sm:$0xff]
    %v37 = vld [vmem:[%s1 + $0x10] sm:$0xff]
    %v38 = vld [vmem:[%s1 + $0x18] sm:$0xff]
    %v39 = vld [vmem:[%s1 + $0x20] sm:$0xff]
    %v40 = vld [vmem:[%s1 + $0x28] sm:$0xff]
    %v41 = vld [vmem:[%s1 + $0x30] sm:$0xff]
    %v42 = vld [vmem:[%s1 + $0x38] sm:$0xff]
    %v43 = vld [vmem:[%s1 + $0x40] sm:$0xff]
    %v44 = vld [vmem:[%s1 + $0x48] sm:$0xff]
    %v45 = vld [vmem:[%s1 + $0x50] sm:$0xff]
    %v46 = vld [vmem:[%s1 + $0x58] sm:$0xff]
    %v47 = vld [vmem:[%s1 + $0x60] sm:$0xff]
    %v48 = vld [vmem:[%s1 + $0x68] sm:$0xff]
    %v49 = vld [vmem:[%s1 + $0x70] sm:$0xff]
    %v50 = vld [vmem:[%s1 + $0x78] sm:$0xff]
    %v51 = vld [vmem:[%s1 + $0x80] sm:$0xff]
    %v52 = vld [vmem:[%s1 + $0x88] sm:$0xff]
    %v53 = vld [vmem:[%s1 + $0x90] sm:$0xff]
    %v54 = vld [vmem:[%s1 + $0x98] sm:$0xff]
    %v55 = vld [vmem:[%s1 + $0xa0] sm:$0xff]
    %v56 = vld [vmem:[%s1 + $0xa8] sm:$0xff]
    %v57 = vld [vmem:[%s1 + $0xb0] sm:$0xff]
    %v58 = vld [vmem:[%s1 + $0xb8] sm:$0xff]
    %v59 = vld [vmem:[%s2] sm:$0x1]
    %v61 = vlaneseq
    %v62 = vshrl.u32 %v61, 7
    %v63 = vsub.s32 0, %v62
    %v64 = vrot.slane %v59, %v63
    %vm66 = vcmask 523264
    %v68 = vsel %vm66, %v28, 0
    %v71 = vsel %vm66, %v30, 0
    %v74 = vsel %vm66, %v32, 0
    %v77 = vsel %vm66, %v34, 0
    %79 = vmatprep.subr.mxu0 0.0
    %80 = vmatpush1.msra.mxu0 %v50
    %81 = vmatprep.subr.mxu0 0.0
    %82 = vmatpush1.msra.mxu0 %v49
    %83 = vmatprep.subr.mxu0 0.0
    %84 = vmatpush1.msra.mxu0 %v48
    %85 = vmatprep.subr.mxu0 0.0
    %86 = vmatpush1.msra.mxu0 %v47
    %87 = vmatprep.subr.mxu0 0.0
    %88 = vmatpush1.msra.mxu0 %v46
    %89 = vmatprep.subr.mxu0 0.0
    %90 = vmatpush1.msra.mxu0 %v45
    %91 = vmatprep.subr.mxu0 0.0
    %92 = vmatpush1.msra.mxu0 %v44
    %93 = vmatprep.subr.mxu0 0.0
    %94 = vmatpush1.msra.mxu0 %v43
    %95 = vmatprep.subr.mxu0 0.0
    %96 = vmatpush1.msra.mxu0 %v42
    %97 = vmatprep.subr.mxu0 0.0
    %98 = vmatpush1.msra.mxu0 %v41
    %99 = vmatprep.subr.mxu0 0.0
    %100 = vmatpush1.msra.mxu0 %v40
    %101 = vmatprep.subr.mxu0 0.0
    %102 = vmatpush1.msra.mxu0 %v39
    %103 = vmatprep.subr.mxu0 0.0
    %104 = vmatpush1.msra.mxu0 %v38
    %105 = vmatprep.subr.mxu0 0.0
    %106 = vmatpush1.msra.mxu0 %v37
    %107 = vmatprep.subr.mxu0 0.0
    %108 = vmatpush1.msra.mxu0 %v36
    %109 = vmatprep.subr.mxu0 0.0
    %110 = vmatpush1.msra.mxu0 %v35
    %111 = vmatprep.subr.mxu0 0.0
    %112 = vmatpush2.msra.mxu0 0.0
    %113 = vmatprep.subr.mxu0 0.0
    %114 = vmatpush2.msra.mxu0 0.0
    %115 = vmatprep.subr.mxu0 0.0
    %116 = vmatpush2.msra.mxu0 0.0
    %117 = vmatprep.subr.mxu0 0.0
    %118 = vmatpush2.msra.mxu0 0.0
    %119 = vmatprep.subr.mxu0 0.0
    %120 = vmatpush2.msra.mxu0 0.0
    %121 = vmatprep.subr.mxu0 0.0
    %122 = vmatpush2.msra.mxu0 0.0
    %123 = vmatprep.subr.mxu0 0.0
    %124 = vmatpush2.msra.mxu0 0.0
    %125 = vmatprep.subr.mxu0 0.0
    %126 = vmatpush2.msra.mxu0 0.0
    %127 = vmatprep.subr.mxu0 0.0
    %128 = vmatpush2.msra.mxu0 %v58
    %129 = vmatprep.subr.mxu0 0.0
    %130 = vmatpush2.msra.mxu0 %v57
    %131 = vmatprep.subr.mxu0 0.0
    %132 = vmatpush2.msra.mxu0 %v56
    %133 = vmatprep.subr.mxu0 0.0
    %134 = vmatpush2.msra.mxu0 %v55
    %135 = vmatprep.subr.mxu0 0.0
    %136 = vmatpush2.msra.mxu0 %v54
    %137 = vmatprep.subr.mxu0 0.0
    %138 = vmatpush2.msra.mxu0 %v53
    %139 = vmatprep.subr.mxu0 0.0
    %140 = vmatpush2.msra.mxu0 %v52
    %141 = vmatprep.subr.mxu0 0.0
    %142 = vmatpush2.msra.mxu0 %v51
    %143 = vmatprep.mubr.f32.mxu0 %v68
    %144 = vmatmul.mubr.f32.gmra.mxu0 %v27
    %v145 = vpop.f32.mrf.mxu0
    %v146 = vadd.f32 %v64, %v145
    %v147 = vpop.f32.mrf.mxu0
    %148 = vmatprep.mubr.f32.mxu0 %v71
    %149 = vmatmul.mubr.f32.gmra.mxu0 %v29
    %v150 = vpop.f32.mrf.mxu0
    %v151 = vadd.f32 %v64, %v150
    %v152 = vpop.f32.mrf.mxu0
    %153 = vmatprep.mubr.f32.mxu0 %v74
    %154 = vmatmul.mubr.f32.gmra.mxu0 %v31
    %v155 = vpop.f32.mrf.mxu0
    %v156 = vadd.f32 %v64, %v155
    %v157 = vpop.f32.mrf.mxu0
    %158 = vmatprep.mubr.f32.mxu0 %v77
    %159 = vmatmul.mubr.f32.gmra.mxu0 %v33
    %v160 = vpop.f32.mrf.mxu0
    %v161 = vadd.f32 %v64, %v160
    %v162 = vpop.f32.mrf.mxu0
    %163 = vdwg.mxu0
    %v164 = vmax.f32 %v146, 0.0
    %v165 = vmax.f32 %v151, 0.0
    %v166 = vmax.f32 %v156, 0.0
    %v167 = vmax.f32 %v161, 0.0
    %vm172 = vcmask 1046528
    %v173 = vrot.slane %v164, 1
    %v174 = vrot.slane %v165, 1
    %v175 = vsel %vm172, %v173, %v174
    %v176 = vrot.slane %v166, 1
    %v177 = vsel %vm172, %v174, %v176
    %v178 = vrot.slane %v167, 1
    %v179 = vsel %vm172, %v176, %v178
    %vm184 = vcmask 1045504
    %v185 = vrot.slane %v164, 2
    %v186 = vrot.slane %v165, 2
    %v187 = vsel %vm184, %v185, %v186
    %v188 = vrot.slane %v166, 2
    %v189 = vsel %vm184, %v186, %v188
    %v190 = vrot.slane %v167, 2
    %v191 = vsel %vm184, %v188, %v190
    %v196 = vld [vmem:[%s3] sm:$0xff]
    %v197 = vld [vmem:[%s3 + $0x8] sm:$0xff]
    %v198 = vld [vmem:[%s3 + $0x10] sm:$0xff]
    %v199 = vld [vmem:[%s3 + $0x18] sm:$0xff]
    %v200 = vld [vmem:[%s3 + $0x20] sm:$0xff]
    %v201 = vld [vmem:[%s3 + $0x28] sm:$0xff]
    %v202 = vld [vmem:[%s3 + $0x30] sm:$0xff]
    %v203 = vld [vmem:[%s3 + $0x38] sm:$0xff]
    %v204 = vld [vmem:[%s3 + $0x40] sm:$0xff]
    %v205 = vld [vmem:[%s3 + $0x48] sm:$0xff]
    %v206 = vld [vmem:[%s3 + $0x50] sm:$0xff]
    %v207 = vld [vmem:[%s3 + $0x58] sm:$0xff]
    %v208 = vld [vmem:[%s3 + $0x60] sm:$0xff]
    %v209 = vld [vmem:[%s3 + $0x68] sm:$0xff]
    %v210 = vld [vmem:[%s3 + $0x70] sm:$0xff]
    %v211 = vld [vmem:[%s3 + $0x78] sm:$0xff]
    %v212 = vld [vmem:[%s3 + $0x80] sm:$0xff]
    %v213 = vld [vmem:[%s3 + $0x88] sm:$0xff]
    %v214 = vld [vmem:[%s3 + $0x90] sm:$0xff]
    %v215 = vld [vmem:[%s3 + $0x98] sm:$0xff]
    %v216 = vld [vmem:[%s3 + $0xa0] sm:$0xff]
    %v217 = vld [vmem:[%s3 + $0xa8] sm:$0xff]
    %v218 = vld [vmem:[%s3 + $0xb0] sm:$0xff]
    %v219 = vld [vmem:[%s3 + $0xb8] sm:$0xff]
    %v220 = vld [vmem:[%s3 + $0xc0] sm:$0xff]
    %v221 = vld [vmem:[%s3 + $0xc8] sm:$0xff]
    %v222 = vld [vmem:[%s3 + $0xd0] sm:$0xff]
    %v223 = vld [vmem:[%s3 + $0xd8] sm:$0xff]
    %v224 = vld [vmem:[%s3 + $0xe0] sm:$0xff]
    %v225 = vld [vmem:[%s3 + $0xe8] sm:$0xff]
    %v226 = vld [vmem:[%s3 + $0xf0] sm:$0xff]
    %v227 = vld [vmem:[%s3 + $0xf8] sm:$0xff]
    %v228 = vld [vmem:[%s3 + $0x100] sm:$0xff]
    %v229 = vld [vmem:[%s3 + $0x108] sm:$0xff]
    %v230 = vld [vmem:[%s3 + $0x110] sm:$0xff]
    %v231 = vld [vmem:[%s3 + $0x118] sm:$0xff]
    %v232 = vld [vmem:[%s3 + $0x120] sm:$0xff]
    %v233 = vld [vmem:[%s3 + $0x128] sm:$0xff]
    %v234 = vld [vmem:[%s3 + $0x130] sm:$0xff]
    %v235 = vld [vmem:[%s3 + $0x138] sm:$0xff]
    %v236 = vld [vmem:[%s3 + $0x140] sm:$0xff]
    %v237 = vld [vmem:[%s3 + $0x148] sm:$0xff]
    %v238 = vld [vmem:[%s3 + $0x150] sm:$0xff]
    %v239 = vld [vmem:[%s3 + $0x158] sm:$0xff]
    %v240 = vld [vmem:[%s3 + $0x160] sm:$0xff]
    %v241 = vld [vmem:[%s3 + $0x168] sm:$0xff]
    %v242 = vld [vmem:[%s3 + $0x170] sm:$0xff]
    %v243 = vld [vmem:[%s3 + $0x178] sm:$0xff]
    %v244 = vld [vmem:[%s4] sm:$0x1]
    %v246 = vlaneseq
    %v247 = vshrl.u32 %v246, 7
    %v248 = vsub.s32 0, %v247
    %v249 = vrot.slane %v244, %v248
    %251 = vmatprep.subr.mxu0 0.0
    %252 = vmatpush1.msra.mxu0 %v211
    %253 = vmatprep.subr.mxu0 0.0
    %254 = vmatpush1.msra.mxu0 %v210
    %255 = vmatprep.subr.mxu0 0.0
    %256 = vmatpush1.msra.mxu0 %v209
    %257 = vmatprep.subr.mxu0 0.0
    %258 = vmatpush1.msra.mxu0 %v208
    %259 = vmatprep.subr.mxu0 0.0
    %260 = vmatpush1.msra.mxu0 %v207
    %261 = vmatprep.subr.mxu0 0.0
    %262 = vmatpush1.msra.mxu0 %v206
    %263 = vmatprep.subr.mxu0 0.0
    %264 = vmatpush1.msra.mxu0 %v205
    %265 = vmatprep.subr.mxu0 0.0
    %266 = vmatpush1.msra.mxu0 %v204
    %267 = vmatprep.subr.mxu0 0.0
    %268 = vmatpush1.msra.mxu0 %v203
    %269 = vmatprep.subr.mxu0 0.0
    %270 = vmatpush1.msra.mxu0 %v202
    %271 = vmatprep.subr.mxu0 0.0
    %272 = vmatpush1.msra.mxu0 %v201
    %273 = vmatprep.subr.mxu0 0.0
    %274 = vmatpush1.msra.mxu0 %v200
    %275 = vmatprep.subr.mxu0 0.0
    %276 = vmatpush1.msra.mxu0 %v199
    %277 = vmatprep.subr.mxu0 0.0
    %278 = vmatpush1.msra.mxu0 %v198
    %279 = vmatprep.subr.mxu0 0.0
    %280 = vmatpush1.msra.mxu0 %v197
    %281 = vmatprep.subr.mxu0 0.0
    %282 = vmatpush1.msra.mxu0 %v196
    %283 = vmatprep.subr.mxu0 0.0
    %284 = vmatpush2.msra.mxu0 %v227
    %285 = vmatprep.subr.mxu0 0.0
    %286 = vmatpush2.msra.mxu0 %v226
    %287 = vmatprep.subr.mxu0 0.0
    %288 = vmatpush2.msra.mxu0 %v225
    %289 = vmatprep.subr.mxu0 0.0
    %290 = vmatpush2.msra.mxu0 %v224
    %291 = vmatprep.subr.mxu0 0.0
    %292 = vmatpush2.msra.mxu0 %v223
    %293 = vmatprep.subr.mxu0 0.0
    %294 = vmatpush2.msra.mxu0 %v222
    %295 = vmatprep.subr.mxu0 0.0
    %296 = vmatpush2.msra.mxu0 %v221
    %297 = vmatprep.subr.mxu0 0.0
    %298 = vmatpush2.msra.mxu0 %v220
    %299 = vmatprep.subr.mxu0 0.0
    %300 = vmatpush2.msra.mxu0 %v219
    %301 = vmatprep.subr.mxu0 0.0
    %302 = vmatpush2.msra.mxu0 %v218
    %303 = vmatprep.subr.mxu0 0.0
    %304 = vmatpush2.msra.mxu0 %v217
    %305 = vmatprep.subr.mxu0 0.0
    %306 = vmatpush2.msra.mxu0 %v216
    %307 = vmatprep.subr.mxu0 0.0
    %308 = vmatpush2.msra.mxu0 %v215
    %309 = vmatprep.subr.mxu0 0.0
    %310 = vmatpush2.msra.mxu0 %v214
    %311 = vmatprep.subr.mxu0 0.0
    %312 = vmatpush2.msra.mxu0 %v213
    %313 = vmatprep.subr.mxu0 0.0
    %314 = vmatpush2.msra.mxu0 %v212
    %315 = vmatprep.mubr.f32.mxu0 %v175
    %316 = vmatmul.mubr.f32.gmra.mxu0 %v164
    %v317 = vpop.f32.mrf.mxu0
    %v318 = vadd.f32 %v249, %v317
    %v319 = vpop.f32.mrf.mxu0
    %320 = vmatprep.mubr.f32.mxu0 %v177
    %321 = vmatmul.mubr.f32.gmra.mxu0 %v165
    %v322 = vpop.f32.mrf.mxu0
    %v323 = vadd.f32 %v249, %v322
    %v324 = vpop.f32.mrf.mxu0
    %325 = vmatprep.mubr.f32.mxu0 %v179
    %326 = vmatmul.mubr.f32.gmra.mxu0 %v166
    %v327 = vpop.f32.mrf.mxu0
    %v328 = vadd.f32 %v249, %v327
    %v329 = vpop.f32.mrf.mxu0
    %330 = vmatprep.mubr.f32.mxu0 %v178
    %331 = vmatmul.mubr.f32.gmra.mxu0 %v167
    %v332 = vpop.f32.mrf.mxu0
    %v333 = vadd.f32 %v249, %v332
    %v334 = vpop.f32.mrf.mxu0
    %335 = vdwg.mxu0
    %336 = vmatprep.subr.mxu0 0.0
    %337 = vmatpush1.msra.mxu0 %v243
    %338 = vmatprep.subr.mxu0 0.0
    %339 = vmatpush1.msra.mxu0 %v242
    %340 = vmatprep.subr.mxu0 0.0
    %341 = vmatpush1.msra.mxu0 %v241
    %342 = vmatprep.subr.mxu0 0.0
    %343 = vmatpush1.msra.mxu0 %v240
    %344 = vmatprep.subr.mxu0 0.0
    %345 = vmatpush1.msra.mxu0 %v239
    %346 = vmatprep.subr.mxu0 0.0
    %347 = vmatpush1.msra.mxu0 %v238
    %348 = vmatprep.subr.mxu0 0.0
    %349 = vmatpush1.msra.mxu0 %v237
    %350 = vmatprep.subr.mxu0 0.0
    %351 = vmatpush1.msra.mxu0 %v236
    %352 = vmatprep.subr.mxu0 0.0
    %353 = vmatpush1.msra.mxu0 %v235
    %354 = vmatprep.subr.mxu0 0.0
    %355 = vmatpush1.msra.mxu0 %v234
    %356 = vmatprep.subr.mxu0 0.0
    %357 = vmatpush1.msra.mxu0 %v233
    %358 = vmatprep.subr.mxu0 0.0
    %359 = vmatpush1.msra.mxu0 %v232
    %360 = vmatprep.subr.mxu0 0.0
    %361 = vmatpush1.msra.mxu0 %v231
    %362 = vmatprep.subr.mxu0 0.0
    %363 = vmatpush1.msra.mxu0 %v230
    %364 = vmatprep.subr.mxu0 0.0
    %365 = vmatpush1.msra.mxu0 %v229
    %366 = vmatprep.subr.mxu0 0.0
    %367 = vmatpush1.msra.mxu0 %v228
    %368 = vmatprep.subr.mxu0 0.0
    %369 = vmatpush2.msra.mxu0 0.0
    %370 = vmatprep.subr.mxu0 0.0
    %371 = vmatpush2.msra.mxu0 0.0
    %372 = vmatprep.subr.mxu0 0.0
    %373 = vmatpush2.msra.mxu0 0.0
    %374 = vmatprep.subr.mxu0 0.0
    %375 = vmatpush2.msra.mxu0 0.0
    %376 = vmatprep.subr.mxu0 0.0
    %377 = vmatpush2.msra.mxu0 0.0
    %378 = vmatprep.subr.mxu0 0.0
    %379 = vmatpush2.msra.mxu0 0.0
    %380 = vmatprep.subr.mxu0 0.0
    %381 = vmatpush2.msra.mxu0 0.0
    %382 = vmatprep.subr.mxu0 0.0
    %383 = vmatpush2.msra.mxu0 0.0
    %384 = vmatprep.subr.mxu0 0.0
    %385 = vmatpush2.msra.mxu0 0.0
    %386 = vmatprep.subr.mxu0 0.0
    %387 = vmatpush2.msra.mxu0 0.0
    %388 = vmatprep.subr.mxu0 0.0
    %389 = vmatpush2.msra.mxu0 0.0
    %390 = vmatprep.subr.mxu0 0.0
    %391 = vmatpush2.msra.mxu0 0.0
    %392 = vmatprep.subr.mxu0 0.0
    %393 = vmatpush2.msra.mxu0 0.0
    %394 = vmatprep.subr.mxu0 0.0
    %395 = vmatpush2.msra.mxu0 0.0
    %396 = vmatprep.subr.mxu0 0.0
    %397 = vmatpush2.msra.mxu0 0.0
    %398 = vmatprep.subr.mxu0 0.0
    %399 = vmatpush2.msra.mxu0 0.0
    %400 = vmatprep.mubr.f32.mxu0 0.0
    %401 = vmatmul.mubr.f32.gmra.mxu0 %v187
    %v402 = vpop.f32.mrf.mxu0
    %v403 = vadd.f32 %v318, %v402
    %v404 = vpop.f32.mrf.mxu0
    %405 = vmatprep.mubr.f32.mxu0 0.0
    %406 = vmatmul.mubr.f32.gmra.mxu0 %v189
    %v407 = vpop.f32.mrf.mxu0
    %v408 = vadd.f32 %v323, %v407
    %v409 = vpop.f32.mrf.mxu0
    %410 = vmatprep.mubr.f32.mxu0 0.0
    %411 = vmatmul.mubr.f32.gmra.mxu0 %v191
    %v412 = vpop.f32.mrf.mxu0
    %v413 = vadd.f32 %v328, %v412
    %v414 = vpop.f32.mrf.mxu0
    %415 = vmatprep.mubr.f32.mxu0 0.0
    %416 = vmatmul.mubr.f32.gmra.mxu0 %v190
    %v417 = vpop.f32.mrf.mxu0
    %v418 = vadd.f32 %v333, %v417
    %v419 = vpop.f32.mrf.mxu0
    %420 = vdwg.mxu0
    %v421 = vmax.f32 %v403, 0.0
    %v422 = vmax.f32 %v408, 0.0
    %v423 = vmax.f32 %v413, 0.0
    %v424 = vmax.f32 %v418, 0.0
    %425 = vst [vmem:[#allocation2] sm:$0xff] %v421
    %426 = vst [vmem:[#allocation2 + $0x8] sm:$0xff] %v422
    %427 = vst [vmem:[#allocation2 + $0x10] sm:$0xff] %v423
    %428 = vst [vmem:[#allocation2 + $0x18] sm:$0x3] %v424
    %v429 = vld [vmem:[#allocation2] ss:$14 sm:$0x3]
    %s430 = scalar_lea.vmem [#allocation2], 1
    %v431 = vld [vmem:[%s430] ss:$14 sm:$0x3]
    %s432 = scalar_lea.vmem [#allocation2], 2
    %v433 = vld [vmem:[%s432] ss:$14 sm:$0x3]
    %s434 = scalar_lea.vmem [#allocation2], 3
    %v435 = vld [vmem:[%s434] ss:$14 sm:$0x3]
    %s436 = scalar_lea.vmem [#allocation2], 4
    %v437 = vld [vmem:[%s436] ss:$14 sm:$0x3]
    %s438 = scalar_lea.vmem [#allocation2], 5
    %v439 = vld [vmem:[%s438] ss:$14 sm:$0x3]
    %s440 = scalar_lea.vmem [#allocation2], 6
    %v441 = vld [vmem:[%s440] ss:$14 sm:$0x3]
    %s442 = scalar_lea.vmem [#allocation2], 7
    %v443 = vld [vmem:[%s442] ss:$14 sm:$0x3]
    %s444 = scalar_lea.vmem [#allocation2], 8
    %v445 = vld [vmem:[%s444] ss:$14 sm:$0x3]
    %s446 = scalar_lea.vmem [#allocation2], 9
    %v447 = vld [vmem:[%s446] ss:$14 sm:$0x3]
    %s448 = scalar_lea.vmem [#allocation2], 10
    %v449 = vld [vmem:[%s448] ss:$14 sm:$0x3]
    %s450 = scalar_lea.vmem [#allocation2], 11
    %v451 = vld [vmem:[%s450] ss:$14 sm:$0x3]
    %v452 = vld [vmem:[%s5] sm:$0xff]
    %v453 = vld [vmem:[%s5 + $0x8] sm:$0xff]
    %v454 = vld [vmem:[%s5 + $0x10] sm:$0xff]
    %v455 = vld [vmem:[%s5 + $0x18] sm:$0xff]
    %v456 = vld [vmem:[%s5 + $0x20] sm:$0xff]
    %v457 = vld [vmem:[%s5 + $0x28] sm:$0xff]
    %v458 = vld [vmem:[%s5 + $0x30] sm:$0xff]
    %v459 = vld [vmem:[%s5 + $0x38] sm:$0xff]
    %v460 = vld [vmem:[%s5 + $0x40] sm:$0xff]
    %v461 = vld [vmem:[%s5 + $0x48] sm:$0xff]
    %v462 = vld [vmem:[%s5 + $0x50] sm:$0xff]
    %v463 = vld [vmem:[%s5 + $0x58] sm:$0xff]
    %v464 = vld [vmem:[%s5 + $0x60] sm:$0xff]
    %v465 = vld [vmem:[%s5 + $0x68] sm:$0xff]
    %v466 = vld [vmem:[%s5 + $0x70] sm:$0xff]
    %v467 = vld [vmem:[%s5 + $0x78] sm:$0xff]
    %v468 = vld [vmem:[%s5 + $0x80] sm:$0xff]
    %v469 = vld [vmem:[%s5 + $0x88] sm:$0xff]
    %v470 = vld [vmem:[%s5 + $0x90] sm:$0xff]
    %v471 = vld [vmem:[%s5 + $0x98] sm:$0xff]
    %v472 = vld [vmem:[%s5 + $0xa0] sm:$0xff]
    %v473 = vld [vmem:[%s5 + $0xa8] sm:$0xff]
    %v474 = vld [vmem:[%s5 + $0xb0] sm:$0xff]
    %v475 = vld [vmem:[%s5 + $0xb8] sm:$0xff]
    %v476 = vld [vmem:[%s5 + $0xc0] sm:$0xff]
    %v477 = vld [vmem:[%s5 + $0xc8] sm:$0xff]
    %v478 = vld [vmem:[%s5 + $0xd0] sm:$0xff]
    %v479 = vld [vmem:[%s5 + $0xd8] sm:$0xff]
    %v480 = vld [vmem:[%s5 + $0xe0] sm:$0xff]
    %v481 = vld [vmem:[%s5 + $0xe8] sm:$0xff]
    %v482 = vld [vmem:[%s5 + $0xf0] sm:$0xff]
    %v483 = vld [vmem:[%s5 + $0xf8] sm:$0xff]
    %v484 = vld [vmem:[%s5 + $0x100] sm:$0xff]
    %v485 = vld [vmem:[%s5 + $0x108] sm:$0xff]
    %v486 = vld [vmem:[%s5 + $0x110] sm:$0xff]
    %v487 = vld [vmem:[%s5 + $0x118] sm:$0xff]
    %v488 = vld [vmem:[%s5 + $0x120] sm:$0xff]
    %v489 = vld [vmem:[%s5 + $0x128] sm:$0xff]
    %v490 = vld [vmem:[%s5 + $0x130] sm:$0xff]
    %v491 = vld [vmem:[%s5 + $0x138] sm:$0xff]
    %v492 = vld [vmem:[%s5 + $0x140] sm:$0xff]
    %v493 = vld [vmem:[%s5 + $0x148] sm:$0xff]
    %v494 = vld [vmem:[%s5 + $0x150] sm:$0xff]
    %v495 = vld [vmem:[%s5 + $0x158] sm:$0xff]
    %v496 = vld [vmem:[%s5 + $0x160] sm:$0xff]
    %v497 = vld [vmem:[%s5 + $0x168] sm:$0xff]
    %v498 = vld [vmem:[%s5 + $0x170] sm:$0xff]
    %v499 = vld [vmem:[%s5 + $0x178] sm:$0xff]
    %v500 = vld [vmem:[%s5 + $0x180] sm:$0xff]
    %v501 = vld [vmem:[%s5 + $0x188] sm:$0xff]
    %v502 = vld [vmem:[%s5 + $0x190] sm:$0xff]
    %v503 = vld [vmem:[%s5 + $0x198] sm:$0xff]
    %v504 = vld [vmem:[%s5 + $0x1a0] sm:$0xff]
    %v505 = vld [vmem:[%s5 + $0x1a8] sm:$0xff]
    %v506 = vld [vmem:[%s5 + $0x1b0] sm:$0xff]
    %v507 = vld [vmem:[%s5 + $0x1b8] sm:$0xff]
    %v508 = vld [vmem:[%s5 + $0x1c0] sm:$0xff]
    %v509 = vld [vmem:[%s5 + $0x1c8] sm:$0xff]
    %v510 = vld [vmem:[%s5 + $0x1d0] sm:$0xff]
    %v511 = vld [vmem:[%s5 + $0x1d8] sm:$0xff]
    %v512 = vld [vmem:[%s5 + $0x1e0] sm:$0xff]
    %v513 = vld [vmem:[%s5 + $0x1e8] sm:$0xff]
    %v514 = vld [vmem:[%s5 + $0x1f0] sm:$0xff]
    %v515 = vld [vmem:[%s5 + $0x1f8] sm:$0xff]
    %v516 = vld [vmem:[%s5 + $0x200] sm:$0xff]
    %v517 = vld [vmem:[%s5 + $0x208] sm:$0xff]
    %v518 = vld [vmem:[%s5 + $0x210] sm:$0xff]
    %v519 = vld [vmem:[%s5 + $0x218] sm:$0xff]
    %v520 = vld [vmem:[%s5 + $0x220] sm:$0xff]
    %v521 = vld [vmem:[%s5 + $0x228] sm:$0xff]
    %v522 = vld [vmem:[%s5 + $0x230] sm:$0xff]
    %v523 = vld [vmem:[%s5 + $0x238] sm:$0xff]
    %v524 = vld [vmem:[%s5 + $0x240] sm:$0xff]
    %v525 = vld [vmem:[%s5 + $0x248] sm:$0xff]
    %v526 = vld [vmem:[%s5 + $0x250] sm:$0xff]
    %v527 = vld [vmem:[%s5 + $0x258] sm:$0xff]
    %v528 = vld [vmem:[%s5 + $0x260] sm:$0xff]
    %v529 = vld [vmem:[%s5 + $0x268] sm:$0xff]
    %v530 = vld [vmem:[%s5 + $0x270] sm:$0xff]
    %v531 = vld [vmem:[%s5 + $0x278] sm:$0xff]
    %v532 = vld [vmem:[%s5 + $0x280] sm:$0xff]
    %v533 = vld [vmem:[%s5 + $0x288] sm:$0xff]
    %v534 = vld [vmem:[%s5 + $0x290] sm:$0xff]
    %v535 = vld [vmem:[%s5 + $0x298] sm:$0xff]
    %v536 = vld [vmem:[%s5 + $0x2a0] sm:$0xff]
    %v537 = vld [vmem:[%s5 + $0x2a8] sm:$0xff]
    %v538 = vld [vmem:[%s5 + $0x2b0] sm:$0xff]
    %v539 = vld [vmem:[%s5 + $0x2b8] sm:$0xff]
    %v540 = vld [vmem:[%s5 + $0x2c0] sm:$0xff]
    %v541 = vld [vmem:[%s5 + $0x2c8] sm:$0xff]
    %v542 = vld [vmem:[%s5 + $0x2d0] sm:$0xff]
    %v543 = vld [vmem:[%s5 + $0x2d8] sm:$0xff]
    %v544 = vld [vmem:[%s5 + $0x2e0] sm:$0xff]
    %v545 = vld [vmem:[%s5 + $0x2e8] sm:$0xff]
    %v546 = vld [vmem:[%s5 + $0x2f0] sm:$0xff]
    %v547 = vld [vmem:[%s5 + $0x2f8] sm:$0xff]
    %v548 = vld [vmem:[%s5 + $0x300] sm:$0xff]
    %v549 = vld [vmem:[%s5 + $0x308] sm:$0xff]
    %v550 = vld [vmem:[%s5 + $0x310] sm:$0xff]
    %v551 = vld [vmem:[%s5 + $0x318] sm:$0xff]
    %v552 = vld [vmem:[%s5 + $0x320] sm:$0xff]
    %v553 = vld [vmem:[%s5 + $0x328] sm:$0xff]
    %v554 = vld [vmem:[%s5 + $0x330] sm:$0xff]
    %v555 = vld [vmem:[%s5 + $0x338] sm:$0xff]
    %v556 = vld [vmem:[%s5 + $0x340] sm:$0xff]
    %v557 = vld [vmem:[%s5 + $0x348] sm:$0xff]
    %v558 = vld [vmem:[%s5 + $0x350] sm:$0xff]
    %v559 = vld [vmem:[%s5 + $0x358] sm:$0xff]
    %v560 = vld [vmem:[%s5 + $0x360] sm:$0xff]
    %v561 = vld [vmem:[%s5 + $0x368] sm:$0xff]
    %v562 = vld [vmem:[%s5 + $0x370] sm:$0xff]
    %v563 = vld [vmem:[%s5 + $0x378] sm:$0xff]
    %v564 = vld [vmem:[%s5 + $0x380] sm:$0xff]
    %v565 = vld [vmem:[%s5 + $0x388] sm:$0xff]
    %v566 = vld [vmem:[%s5 + $0x390] sm:$0xff]
    %v567 = vld [vmem:[%s5 + $0x398] sm:$0xff]
    %v568 = vld [vmem:[%s5 + $0x3a0] sm:$0xff]
    %v569 = vld [vmem:[%s5 + $0x3a8] sm:$0xff]
    %v570 = vld [vmem:[%s5 + $0x3b0] sm:$0xff]
    %v571 = vld [vmem:[%s5 + $0x3b8] sm:$0xff]
    %v572 = vld [vmem:[%s5 + $0x3c0] sm:$0xff]
    %v573 = vld [vmem:[%s5 + $0x3c8] sm:$0xff]
    %v574 = vld [vmem:[%s5 + $0x3d0] sm:$0xff]
    %v575 = vld [vmem:[%s5 + $0x3d8] sm:$0xff]
    %v576 = vld [vmem:[%s5 + $0x3e0] sm:$0xff]
    %v577 = vld [vmem:[%s5 + $0x3e8] sm:$0xff]
    %v578 = vld [vmem:[%s5 + $0x3f0] sm:$0xff]
    %v579 = vld [vmem:[%s5 + $0x3f8] sm:$0xff]
    %v580 = vld [vmem:[%s5 + $0x400] sm:$0xff]
    %v581 = vld [vmem:[%s5 + $0x408] sm:$0xff]
    %v582 = vld [vmem:[%s5 + $0x410] sm:$0xff]
    %v583 = vld [vmem:[%s5 + $0x418] sm:$0xff]
    %v584 = vld [vmem:[%s5 + $0x420] sm:$0xff]
    %v585 = vld [vmem:[%s5 + $0x428] sm:$0xff]
    %v586 = vld [vmem:[%s5 + $0x430] sm:$0xff]
    %v587 = vld [vmem:[%s5 + $0x438] sm:$0xff]
    %v588 = vld [vmem:[%s5 + $0x440] sm:$0xff]
    %v589 = vld [vmem:[%s5 + $0x448] sm:$0xff]
    %v590 = vld [vmem:[%s5 + $0x450] sm:$0xff]
    %v591 = vld [vmem:[%s5 + $0x458] sm:$0xff]
    %v592 = vld [vmem:[%s5 + $0x460] sm:$0xff]
    %v593 = vld [vmem:[%s5 + $0x468] sm:$0xff]
    %v594 = vld [vmem:[%s5 + $0x470] sm:$0xff]
    %v595 = vld [vmem:[%s5 + $0x478] sm:$0xff]
    %v596 = vld [vmem:[%s5 + $0x480] sm:$0xff]
    %v597 = vld [vmem:[%s5 + $0x488] sm:$0xff]
    %v598 = vld [vmem:[%s5 + $0x490] sm:$0xff]
    %v599 = vld [vmem:[%s5 + $0x498] sm:$0xff]
    %v600 = vld [vmem:[%s5 + $0x4a0] sm:$0xff]
    %v601 = vld [vmem:[%s5 + $0x4a8] sm:$0xff]
    %v602 = vld [vmem:[%s5 + $0x4b0] sm:$0xff]
    %v603 = vld [vmem:[%s5 + $0x4b8] sm:$0xff]
    %v604 = vld [vmem:[%s5 + $0x4c0] sm:$0xff]
    %v605 = vld [vmem:[%s5 + $0x4c8] sm:$0xff]
    %v606 = vld [vmem:[%s5 + $0x4d0] sm:$0xff]
    %v607 = vld [vmem:[%s5 + $0x4d8] sm:$0xff]
    %v608 = vld [vmem:[%s5 + $0x4e0] sm:$0xff]
    %v609 = vld [vmem:[%s5 + $0x4e8] sm:$0xff]
    %v610 = vld [vmem:[%s5 + $0x4f0] sm:$0xff]
    %v611 = vld [vmem:[%s5 + $0x4f8] sm:$0xff]
    %v612 = vld [vmem:[%s5 + $0x500] sm:$0xff]
    %v613 = vld [vmem:[%s5 + $0x508] sm:$0xff]
    %v614 = vld [vmem:[%s5 + $0x510] sm:$0xff]
    %v615 = vld [vmem:[%s5 + $0x518] sm:$0xff]
    %v616 = vld [vmem:[%s5 + $0x520] sm:$0xff]
    %v617 = vld [vmem:[%s5 + $0x528] sm:$0xff]
    %v618 = vld [vmem:[%s5 + $0x530] sm:$0xff]
    %v619 = vld [vmem:[%s5 + $0x538] sm:$0xff]
    %v620 = vld [vmem:[%s5 + $0x540] sm:$0xff]
    %v621 = vld [vmem:[%s5 + $0x548] sm:$0xff]
    %v622 = vld [vmem:[%s5 + $0x550] sm:$0xff]
    %v623 = vld [vmem:[%s5 + $0x558] sm:$0xff]
    %v624 = vld [vmem:[%s5 + $0x560] sm:$0xff]
    %v625 = vld [vmem:[%s5 + $0x568] sm:$0xff]
    %v626 = vld [vmem:[%s5 + $0x570] sm:$0xff]
    %v627 = vld [vmem:[%s5 + $0x578] sm:$0xff]
    %v628 = vld [vmem:[%s5 + $0x580] sm:$0xff]
    %v629 = vld [vmem:[%s5 + $0x588] sm:$0xff]
    %v630 = vld [vmem:[%s5 + $0x590] sm:$0xff]
    %v631 = vld [vmem:[%s5 + $0x598] sm:$0xff]
    %v632 = vld [vmem:[%s5 + $0x5a0] sm:$0xff]
    %v633 = vld [vmem:[%s5 + $0x5a8] sm:$0xff]
    %v634 = vld [vmem:[%s5 + $0x5b0] sm:$0xff]
    %v635 = vld [vmem:[%s5 + $0x5b8] sm:$0xff]
    %v636 = vld [vmem:[%s5 + $0x5c0] sm:$0xff]
    %v637 = vld [vmem:[%s5 + $0x5c8] sm:$0xff]
    %v638 = vld [vmem:[%s5 + $0x5d0] sm:$0xff]
    %v639 = vld [vmem:[%s5 + $0x5d8] sm:$0xff]
    %v640 = vld [vmem:[%s5 + $0x5e0] sm:$0xff]
    %v641 = vld [vmem:[%s5 + $0x5e8] sm:$0xff]
    %v642 = vld [vmem:[%s5 + $0x5f0] sm:$0xff]
    %v643 = vld [vmem:[%s5 + $0x5f8] sm:$0xff]
    %v644 = vld [vmem:[%s6] sm:$0x1]
    %v646 = vlaneseq
    %v647 = vshrl.u32 %v646, 7
    %v648 = vsub.s32 0, %v647
    %v649 = vrot.slane %v644, %v648
    %651 = vmatprep.subr.mxu0 0.0
    %652 = vmatpush1.msra.mxu0 %v467
    %653 = vmatprep.subr.mxu0 0.0
    %654 = vmatpush1.msra.mxu0 %v466
    %655 = vmatprep.subr.mxu0 0.0
    %656 = vmatpush1.msra.mxu0 %v465
    %657 = vmatprep.subr.mxu0 0.0
    %658 = vmatpush1.msra.mxu0 %v464
    %659 = vmatprep.subr.mxu0 0.0
    %660 = vmatpush1.msra.mxu0 %v463
    %661 = vmatprep.subr.mxu0 0.0
    %662 = vmatpush1.msra.mxu0 %v462
    %663 = vmatprep.subr.mxu0 0.0
    %664 = vmatpush1.msra.mxu0 %v461
    %665 = vmatprep.subr.mxu0 0.0
    %666 = vmatpush1.msra.mxu0 %v460
    %667 = vmatprep.subr.mxu0 0.0
    %668 = vmatpush1.msra.mxu0 %v459
    %669 = vmatprep.subr.mxu0 0.0
    %670 = vmatpush1.msra.mxu0 %v458
    %671 = vmatprep.subr.mxu0 0.0
    %672 = vmatpush1.msra.mxu0 %v457
    %673 = vmatprep.subr.mxu0 0.0
    %674 = vmatpush1.msra.mxu0 %v456
    %675 = vmatprep.subr.mxu0 0.0
    %676 = vmatpush1.msra.mxu0 %v455
    %677 = vmatprep.subr.mxu0 0.0
    %678 = vmatpush1.msra.mxu0 %v454
    %679 = vmatprep.subr.mxu0 0.0
    %680 = vmatpush1.msra.mxu0 %v453
    %681 = vmatprep.subr.mxu0 0.0
    %682 = vmatpush1.msra.mxu0 %v452
    %683 = vmatprep.subr.mxu0 0.0
    %684 = vmatpush2.msra.mxu0 %v483
    %685 = vmatprep.subr.mxu0 0.0
    %686 = vmatpush2.msra.mxu0 %v482
    %687 = vmatprep.subr.mxu0 0.0
    %688 = vmatpush2.msra.mxu0 %v481
    %689 = vmatprep.subr.mxu0 0.0
    %690 = vmatpush2.msra.mxu0 %v480
    %691 = vmatprep.subr.mxu0 0.0
    %692 = vmatpush2.msra.mxu0 %v479
    %693 = vmatprep.subr.mxu0 0.0
    %694 = vmatpush2.msra.mxu0 %v478
    %695 = vmatprep.subr.mxu0 0.0
    %696 = vmatpush2.msra.mxu0 %v477
    %697 = vmatprep.subr.mxu0 0.0
    %698 = vmatpush2.msra.mxu0 %v476
    %699 = vmatprep.subr.mxu0 0.0
    %700 = vmatpush2.msra.mxu0 %v475
    %701 = vmatprep.subr.mxu0 0.0
    %702 = vmatpush2.msra.mxu0 %v474
    %703 = vmatprep.subr.mxu0 0.0
    %704 = vmatpush2.msra.mxu0 %v473
    %705 = vmatprep.subr.mxu0 0.0
    %706 = vmatpush2.msra.mxu0 %v472
    %707 = vmatprep.subr.mxu0 0.0
    %708 = vmatpush2.msra.mxu0 %v471
    %709 = vmatprep.subr.mxu0 0.0
    %710 = vmatpush2.msra.mxu0 %v470
    %711 = vmatprep.subr.mxu0 0.0
    %712 = vmatpush2.msra.mxu0 %v469
    %713 = vmatprep.subr.mxu0 0.0
    %714 = vmatpush2.msra.mxu0 %v468
    %715 = vmatprep.mubr.f32.mxu0 %v431
    %716 = vmatmul.mubr.f32.gmra.mxu0 %v429
    %v717 = vpop.f32.mrf.mxu0
    %v718 = vadd.f32 %v649, %v717
    %v719 = vpop.f32.mrf.mxu0
    %720 = vdwg.mxu0
    %721 = vmatprep.subr.mxu0 0.0
    %722 = vmatpush1.msra.mxu0 %v499
    %723 = vmatprep.subr.mxu0 0.0
    %724 = vmatpush1.msra.mxu0 %v498
    %725 = vmatprep.subr.mxu0 0.0
    %726 = vmatpush1.msra.mxu0 %v497
    %727 = vmatprep.subr.mxu0 0.0
    %728 = vmatpush1.msra.mxu0 %v496
    %729 = vmatprep.subr.mxu0 0.0
    %730 = vmatpush1.msra.mxu0 %v495
    %731 = vmatprep.subr.mxu0 0.0
    %732 = vmatpush1.msra.mxu0 %v494
    %733 = vmatprep.subr.mxu0 0.0
    %734 = vmatpush1.msra.mxu0 %v493
    %735 = vmatprep.subr.mxu0 0.0
    %736 = vmatpush1.msra.mxu0 %v492
    %737 = vmatprep.subr.mxu0 0.0
    %738 = vmatpush1.msra.mxu0 %v491
    %739 = vmatprep.subr.mxu0 0.0
    %740 = vmatpush1.msra.mxu0 %v490
    %741 = vmatprep.subr.mxu0 0.0
    %742 = vmatpush1.msra.mxu0 %v489
    %743 = vmatprep.subr.mxu0 0.0
    %744 = vmatpush1.msra.mxu0 %v488
    %745 = vmatprep.subr.mxu0 0.0
    %746 = vmatpush1.msra.mxu0 %v487
    %747 = vmatprep.subr.mxu0 0.0
    %748 = vmatpush1.msra.mxu0 %v486
    %749 = vmatprep.subr.mxu0 0.0
    %750 = vmatpush1.msra.mxu0 %v485
    %751 = vmatprep.subr.mxu0 0.0
    %752 = vmatpush1.msra.mxu0 %v484
    %753 = vmatprep.subr.mxu0 0.0
    %754 = vmatpush2.msra.mxu0 %v515
    %755 = vmatprep.subr.mxu0 0.0
    %756 = vmatpush2.msra.mxu0 %v514
    %757 = vmatprep.subr.mxu0 0.0
    %758 = vmatpush2.msra.mxu0 %v513
    %759 = vmatprep.subr.mxu0 0.0
    %760 = vmatpush2.msra.mxu0 %v512
    %761 = vmatprep.subr.mxu0 0.0
    %762 = vmatpush2.msra.mxu0 %v511
    %763 = vmatprep.subr.mxu0 0.0
    %764 = vmatpush2.msra.mxu0 %v510
    %765 = vmatprep.subr.mxu0 0.0
    %766 = vmatpush2.msra.mxu0 %v509
    %767 = vmatprep.subr.mxu0 0.0
    %768 = vmatpush2.msra.mxu0 %v508
    %769 = vmatprep.subr.mxu0 0.0
    %770 = vmatpush2.msra.mxu0 %v507
    %771 = vmatprep.subr.mxu0 0.0
    %772 = vmatpush2.msra.mxu0 %v506
    %773 = vmatprep.subr.mxu0 0.0
    %774 = vmatpush2.msra.mxu0 %v505
    %775 = vmatprep.subr.mxu0 0.0
    %776 = vmatpush2.msra.mxu0 %v504
    %777 = vmatprep.subr.mxu0 0.0
    %778 = vmatpush2.msra.mxu0 %v503
    %779 = vmatprep.subr.mxu0 0.0
    %780 = vmatpush2.msra.mxu0 %v502
    %781 = vmatprep.subr.mxu0 0.0
    %782 = vmatpush2.msra.mxu0 %v501
    %783 = vmatprep.subr.mxu0 0.0
    %784 = vmatpush2.msra.mxu0 %v500
    %785 = vmatprep.mubr.f32.mxu0 %v435
    %786 = vmatmul.mubr.f32.gmra.mxu0 %v433
    %v787 = vpop.f32.mrf.mxu0
    %v788 = vadd.f32 %v718, %v787
    %v789 = vpop.f32.mrf.mxu0
    %790 = vdwg.mxu0
    %791 = vmatprep.subr.mxu0 0.0
    %792 = vmatpush1.msra.mxu0 %v531
    %793 = vmatprep.subr.mxu0 0.0
    %794 = vmatpush1.msra.mxu0 %v530
    %795 = vmatprep.subr.mxu0 0.0
    %796 = vmatpush1.msra.mxu0 %v529
    %797 = vmatprep.subr.mxu0 0.0
    %798 = vmatpush1.msra.mxu0 %v528
    %799 = vmatprep.subr.mxu0 0.0
    %800 = vmatpush1.msra.mxu0 %v527
    %801 = vmatprep.subr.mxu0 0.0
    %802 = vmatpush1.msra.mxu0 %v526
    %803 = vmatprep.subr.mxu0 0.0
    %804 = vmatpush1.msra.mxu0 %v525
    %805 = vmatprep.subr.mxu0 0.0
    %806 = vmatpush1.msra.mxu0 %v524
    %807 = vmatprep.subr.mxu0 0.0
    %808 = vmatpush1.msra.mxu0 %v523
    %809 = vmatprep.subr.mxu0 0.0
    %810 = vmatpush1.msra.mxu0 %v522
    %811 = vmatprep.subr.mxu0 0.0
    %812 = vmatpush1.msra.mxu0 %v521
    %813 = vmatprep.subr.mxu0 0.0
    %814 = vmatpush1.msra.mxu0 %v520
    %815 = vmatprep.subr.mxu0 0.0
    %816 = vmatpush1.msra.mxu0 %v519
    %817 = vmatprep.subr.mxu0 0.0
    %818 = vmatpush1.msra.mxu0 %v518
    %819 = vmatprep.subr.mxu0 0.0
    %820 = vmatpush1.msra.mxu0 %v517
    %821 = vmatprep.subr.mxu0 0.0
    %822 = vmatpush1.msra.mxu0 %v516
    %823 = vmatprep.subr.mxu0 0.0
    %824 = vmatpush2.msra.mxu0 %v547
    %825 = vmatprep.subr.mxu0 0.0
    %826 = vmatpush2.msra.mxu0 %v546
    %827 = vmatprep.subr.mxu0 0.0
    %828 = vmatpush2.msra.mxu0 %v545
    %829 = vmatprep.subr.mxu0 0.0
    %830 = vmatpush2.msra.mxu0 %v544
    %831 = vmatprep.subr.mxu0 0.0
    %832 = vmatpush2.msra.mxu0 %v543
    %833 = vmatprep.subr.mxu0 0.0
    %834 = vmatpush2.msra.mxu0 %v542
    %835 = vmatprep.subr.mxu0 0.0
    %836 = vmatpush2.msra.mxu0 %v541
    %837 = vmatprep.subr.mxu0 0.0
    %838 = vmatpush2.msra.mxu0 %v540
    %839 = vmatprep.subr.mxu0 0.0
    %840 = vmatpush2.msra.mxu0 %v539
    %841 = vmatprep.subr.mxu0 0.0
    %842 = vmatpush2.msra.mxu0 %v538
    %843 = vmatprep.subr.mxu0 0.0
    %844 = vmatpush2.msra.mxu0 %v537
    %845 = vmatprep.subr.mxu0 0.0
    %846 = vmatpush2.msra.mxu0 %v536
    %847 = vmatprep.subr.mxu0 0.0
    %848 = vmatpush2.msra.mxu0 %v535
    %849 = vmatprep.subr.mxu0 0.0
    %850 = vmatpush2.msra.mxu0 %v534
    %851 = vmatprep.subr.mxu0 0.0
    %852 = vmatpush2.msra.mxu0 %v533
    %853 = vmatprep.subr.mxu0 0.0
    %854 = vmatpush2.msra.mxu0 %v532
    %855 = vmatprep.mubr.f32.mxu0 %v439
    %856 = vmatmul.mubr.f32.gmra.mxu0 %v437
    %v857 = vpop.f32.mrf.mxu0
    %v858 = vadd.f32 %v788, %v857
    %v859 = vpop.f32.mrf.mxu0
    %860 = vdwg.mxu0
    %861 = vmatprep.subr.mxu0 0.0
    %862 = vmatpush1.msra.mxu0 %v563
    %863 = vmatprep.subr.mxu0 0.0
    %864 = vmatpush1.msra.mxu0 %v562
    %865 = vmatprep.subr.mxu0 0.0
    %866 = vmatpush1.msra.mxu0 %v561
    %867 = vmatprep.subr.mxu0 0.0
    %868 = vmatpush1.msra.mxu0 %v560
    %869 = vmatprep.subr.mxu0 0.0
    %870 = vmatpush1.msra.mxu0 %v559
    %871 = vmatprep.subr.mxu0 0.0
    %872 = vmatpush1.msra.mxu0 %v558
    %873 = vmatprep.subr.mxu0 0.0
    %874 = vmatpush1.msra.mxu0 %v557
    %875 = vmatprep.subr.mxu0 0.0
    %876 = vmatpush1.msra.mxu0 %v556
    %877 = vmatprep.subr.mxu0 0.0
    %878 = vmatpush1.msra.mxu0 %v555
    %879 = vmatprep.subr.mxu0 0.0
    %880 = vmatpush1.msra.mxu0 %v554
    %881 = vmatprep.subr.mxu0 0.0
    %882 = vmatpush1.msra.mxu0 %v553
    %883 = vmatprep.subr.mxu0 0.0
    %884 = vmatpush1.msra.mxu0 %v552
    %885 = vmatprep.subr.mxu0 0.0
    %886 = vmatpush1.msra.mxu0 %v551
    %887 = vmatprep.subr.mxu0 0.0
    %888 = vmatpush1.msra.mxu0 %v550
    %889 = vmatprep.subr.mxu0 0.0
    %890 = vmatpush1.msra.mxu0 %v549
    %891 = vmatprep.subr.mxu0 0.0
    %892 = vmatpush1.msra.mxu0 %v548
    %893 = vmatprep.subr.mxu0 0.0
    %894 = vmatpush2.msra.mxu0 %v579
    %895 = vmatprep.subr.mxu0 0.0
    %896 = vmatpush2.msra.mxu0 %v578
    %897 = vmatprep.subr.mxu0 0.0
    %898 = vmatpush2.msra.mxu0 %v577
    %899 = vmatprep.subr.mxu0 0.0
    %900 = vmatpush2.msra.mxu0 %v576
    %901 = vmatprep.subr.mxu0 0.0
    %902 = vmatpush2.msra.mxu0 %v575
    %903 = vmatprep.subr.mxu0 0.0
    %904 = vmatpush2.msra.mxu0 %v574
    %905 = vmatprep.subr.mxu0 0.0
    %906 = vmatpush2.msra.mxu0 %v573
    %907 = vmatprep.subr.mxu0 0.0
    %908 = vmatpush2.msra.mxu0 %v572
    %909 = vmatprep.subr.mxu0 0.0
    %910 = vmatpush2.msra.mxu0 %v571
    %911 = vmatprep.subr.mxu0 0.0
    %912 = vmatpush2.msra.mxu0 %v570
    %913 = vmatprep.subr.mxu0 0.0
    %914 = vmatpush2.msra.mxu0 %v569
    %915 = vmatprep.subr.mxu0 0.0
    %916 = vmatpush2.msra.mxu0 %v568
    %917 = vmatprep.subr.mxu0 0.0
    %918 = vmatpush2.msra.mxu0 %v567
    %919 = vmatprep.subr.mxu0 0.0
    %920 = vmatpush2.msra.mxu0 %v566
    %921 = vmatprep.subr.mxu0 0.0
    %922 = vmatpush2.msra.mxu0 %v565
    %923 = vmatprep.subr.mxu0 0.0
    %924 = vmatpush2.msra.mxu0 %v564
    %925 = vmatprep.mubr.f32.mxu0 %v443
    %926 = vmatmul.mubr.f32.gmra.mxu0 %v441
    %v927 = vpop.f32.mrf.mxu0
    %v928 = vadd.f32 %v858, %v927
    %v929 = vpop.f32.mrf.mxu0
    %930 = vdwg.mxu0
    %931 = vmatprep.subr.mxu0 0.0
    %932 = vmatpush1.msra.mxu0 %v595
    %933 = vmatprep.subr.mxu0 0.0
    %934 = vmatpush1.msra.mxu0 %v594
    %935 = vmatprep.subr.mxu0 0.0
    %936 = vmatpush1.msra.mxu0 %v593
    %937 = vmatprep.subr.mxu0 0.0
    %938 = vmatpush1.msra.mxu0 %v592
    %939 = vmatprep.subr.mxu0 0.0
    %940 = vmatpush1.msra.mxu0 %v591
    %941 = vmatprep.subr.mxu0 0.0
    %942 = vmatpush1.msra.mxu0 %v590
    %943 = vmatprep.subr.mxu0 0.0
    %944 = vmatpush1.msra.mxu0 %v589
    %945 = vmatprep.subr.mxu0 0.0
    %946 = vmatpush1.msra.mxu0 %v588
    %947 = vmatprep.subr.mxu0 0.0
    %948 = vmatpush1.msra.mxu0 %v587
    %949 = vmatprep.subr.mxu0 0.0
    %950 = vmatpush1.msra.mxu0 %v586
    %951 = vmatprep.subr.mxu0 0.0
    %952 = vmatpush1.msra.mxu0 %v585
    %953 = vmatprep.subr.mxu0 0.0
    %954 = vmatpush1.msra.mxu0 %v584
    %955 = vmatprep.subr.mxu0 0.0
    %956 = vmatpush1.msra.mxu0 %v583
    %957 = vmatprep.subr.mxu0 0.0
    %958 = vmatpush1.msra.mxu0 %v582
    %959 = vmatprep.subr.mxu0 0.0
    %960 = vmatpush1.msra.mxu0 %v581
    %961 = vmatprep.subr.mxu0 0.0
    %962 = vmatpush1.msra.mxu0 %v580
    %963 = vmatprep.subr.mxu0 0.0
    %964 = vmatpush2.msra.mxu0 %v611
    %965 = vmatprep.subr.mxu0 0.0
    %966 = vmatpush2.msra.mxu0 %v610
    %967 = vmatprep.subr.mxu0 0.0
    %968 = vmatpush2.msra.mxu0 %v609
    %969 = vmatprep.subr.mxu0 0.0
    %970 = vmatpush2.msra.mxu0 %v608
    %971 = vmatprep.subr.mxu0 0.0
    %972 = vmatpush2.msra.mxu0 %v607
    %973 = vmatprep.subr.mxu0 0.0
    %974 = vmatpush2.msra.mxu0 %v606
    %975 = vmatprep.subr.mxu0 0.0
    %976 = vmatpush2.msra.mxu0 %v605
    %977 = vmatprep.subr.mxu0 0.0
    %978 = vmatpush2.msra.mxu0 %v604
    %979 = vmatprep.subr.mxu0 0.0
    %980 = vmatpush2.msra.mxu0 %v603
    %981 = vmatprep.subr.mxu0 0.0
    %982 = vmatpush2.msra.mxu0 %v602
    %983 = vmatprep.subr.mxu0 0.0
    %984 = vmatpush2.msra.mxu0 %v601
    %985 = vmatprep.subr.mxu0 0.0
    %986 = vmatpush2.msra.mxu0 %v600
    %987 = vmatprep.subr.mxu0 0.0
    %988 = vmatpush2.msra.mxu0 %v599
    %989 = vmatprep.subr.mxu0 0.0
    %990 = vmatpush2.msra.mxu0 %v598
    %991 = vmatprep.subr.mxu0 0.0
    %992 = vmatpush2.msra.mxu0 %v597
    %993 = vmatprep.subr.mxu0 0.0
    %994 = vmatpush2.msra.mxu0 %v596
    %995 = vmatprep.mubr.f32.mxu0 %v447
    %996 = vmatmul.mubr.f32.gmra.mxu0 %v445
    %v997 = vpop.f32.mrf.mxu0
    %v998 = vadd.f32 %v928, %v997
    %v999 = vpop.f32.mrf.mxu0
    %1000 = vdwg.mxu0
    %1001 = vmatprep.subr.mxu0 0.0
    %1002 = vmatpush1.msra.mxu0 %v627
    %1003 = vmatprep.subr.mxu0 0.0
    %1004 = vmatpush1.msra.mxu0 %v626
    %1005 = vmatprep.subr.mxu0 0.0
    %1006 = vmatpush1.msra.mxu0 %v625
    %1007 = vmatprep.subr.mxu0 0.0
    %1008 = vmatpush1.msra.mxu0 %v624
    %1009 = vmatprep.subr.mxu0 0.0
    %1010 = vmatpush1.msra.mxu0 %v623
    %1011 = vmatprep.subr.mxu0 0.0
    %1012 = vmatpush1.msra.mxu0 %v622
    %1013 = vmatprep.subr.mxu0 0.0
    %1014 = vmatpush1.msra.mxu0 %v621
    %1015 = vmatprep.subr.mxu0 0.0
    %1016 = vmatpush1.msra.mxu0 %v620
    %1017 = vmatprep.subr.mxu0 0.0
    %1018 = vmatpush1.msra.mxu0 %v619
    %1019 = vmatprep.subr.mxu0 0.0
    %1020 = vmatpush1.msra.mxu0 %v618
    %1021 = vmatprep.subr.mxu0 0.0
    %1022 = vmatpush1.msra.mxu0 %v617
    %1023 = vmatprep.subr.mxu0 0.0
    %1024 = vmatpush1.msra.mxu0 %v616
    %1025 = vmatprep.subr.mxu0 0.0
    %1026 = vmatpush1.msra.mxu0 %v615
    %1027 = vmatprep.subr.mxu0 0.0
    %1028 = vmatpush1.msra.mxu0 %v614
    %1029 = vmatprep.subr.mxu0 0.0
    %1030 = vmatpush1.msra.mxu0 %v613
    %1031 = vmatprep.subr.mxu0 0.0
    %1032 = vmatpush1.msra.mxu0 %v612
    %1033 = vmatprep.subr.mxu0 0.0
    %1034 = vmatpush2.msra.mxu0 %v643
    %1035 = vmatprep.subr.mxu0 0.0
    %1036 = vmatpush2.msra.mxu0 %v642
    %1037 = vmatprep.subr.mxu0 0.0
    %1038 = vmatpush2.msra.mxu0 %v641
    %1039 = vmatprep.subr.mxu0 0.0
    %1040 = vmatpush2.msra.mxu0 %v640
    %1041 = vmatprep.subr.mxu0 0.0
    %1042 = vmatpush2.msra.mxu0 %v639
    %1043 = vmatprep.subr.mxu0 0.0
    %1044 = vmatpush2.msra.mxu0 %v638
    %1045 = vmatprep.subr.mxu0 0.0
    %1046 = vmatpush2.msra.mxu0 %v637
    %1047 = vmatprep.subr.mxu0 0.0
    %1048 = vmatpush2.msra.mxu0 %v636
    %1049 = vmatprep.subr.mxu0 0.0
    %1050 = vmatpush2.msra.mxu0 %v635
    %1051 = vmatprep.subr.mxu0 0.0
    %1052 = vmatpush2.msra.mxu0 %v634
    %1053 = vmatprep.subr.mxu0 0.0
    %1054 = vmatpush2.msra.mxu0 %v633
    %1055 = vmatprep.subr.mxu0 0.0
    %1056 = vmatpush2.msra.mxu0 %v632
    %1057 = vmatprep.subr.mxu0 0.0
    %1058 = vmatpush2.msra.mxu0 %v631
    %1059 = vmatprep.subr.mxu0 0.0
    %1060 = vmatpush2.msra.mxu0 %v630
    %1061 = vmatprep.subr.mxu0 0.0
    %1062 = vmatpush2.msra.mxu0 %v629
    %1063 = vmatprep.subr.mxu0 0.0
    %1064 = vmatpush2.msra.mxu0 %v628
    %1065 = vmatprep.mubr.f32.mxu0 %v451
    %1066 = vmatmul.mubr.f32.gmra.mxu0 %v449
    %v1067 = vpop.f32.mrf.mxu0
    %v1068 = vadd.f32 %v998, %v1067
    %v1069 = vpop.f32.mrf.mxu0
    %1070 = vdwg.mxu0
    %v1071 = vmax.f32 %v1068, 0.0
    %v1072 = vand.u32 2147483647, %v1068
    %v1073 = vsub.f32 0.0, %v1072
    %v1074 = vmul.f32 %v1073, 1.442695
    %v1075 = vpow.pop %v1074
    %v1076 = vadd.f32 %v1075, 1.0
    %v1077 = vlog2.pop %v1076
    %v1078 = vmul.f32 %v1077, 0.6931472
    %v1079 = vadd.f32 %v1071, %v1078
    %vm1080 = vcmask 123904
    %1081 = vst.msk [vmem:[#allocation3] sm:$0x3] %vm1080, %v1079
    // Predicated region
    $region30: #{forward.1} parent=1 // pred_check
      _
    $region31: #{forward.1} parent=1 // pred_check_branch
      %1083 = sbr.rel (0) target = $region33
    $region32: #{forward.1} parent=1 // pred_region
      %s1085 = ssub.s32 32, 32
      %1086 = vsyncadd [#allocation4], %s1085
      %s1088 = sshll.u32 [#allocation3], 4
      %s1089 = int_to_ptr.vmem [resolvable:$true] %s1088
      %1091 = dma.vmem_to_hbm [thread:$0]  %s1089, 32, %s7, [#allocation4]
    $region33: #{forward.1} parent=1 // pred_fallthru
      _
    // Predicated region
    $region34: #{forward.1} parent=1 // pred_check
      _
    $region35: #{forward.1} parent=1 // pred_check_branch
      %1093 = sbr.rel (0) target = $region37
    $region36: #{forward.1} parent=1 // pred_region
      %1094 = dma.done [#allocation4], 32
    $region37: #{forward.1} parent=1 // pred_fallthru
      _
    %1095 = vsyncpa [#allocation4], 1

</llo_original>
